<compile_context>
chip_gen: v7x
topology: tpu7x:2x2x1
jax: 0.10.0
libtpu: 0.0.40
codegen_flags: <defaults>
</compile_context>

<pallas_src>
import jax
import jax.numpy as jnp
from jax import lax
from jax.experimental import pallas as pl
from jax.experimental.pallas import tpu as pltpu  # noqa: F401  (TPU backend)

# ---------------------------------------------------------------------------
# Config (small shapes consistent with the module's forward semantics)
# ---------------------------------------------------------------------------
N_DOCS = 3          # == `batch_size` constant in joint_score_func.py
PAD_TOKEN_ID = 0    # BertTokenizer pad_token_id
# BertTokenizer.bos_token_id is None -> `use_bos` is always False, and
# exclude_bos_score=False, so the bos branch of get_nll never triggers.

B_GROUPS = 2        # number of query groups (rows of target_ids / score)
T_DEC = 8           # decoder / target sequence length
S_ENC = 16          # encoder sequence length
HIDDEN = 32
VOCAB = 128         # synthetic vocab size (lane aligned)
EPSILON = 0.0       # default epsilon in get_nll


# ---------------------------------------------------------------------------
# Fused kernel: LM head projection + RAG NLL (get_nll) hot path.
#   inputs : hidden (rows, H), lm_w (H, V), lm_b (1, V),
#            doc_scores (B, D), target (B, T)  (already shifted, pad appended)
#   outputs: seq_logits (rows, V)
#            per-group [-logsumexp_docs(sum_t ll), -logsumexp_docs(sum_t smooth)]
#            packed as (B, 2)
# ---------------------------------------------------------------------------
def reader3_fused_kernel(x_ref, w_ref, b_ref, scores_ref, tgt_ref,
                         logits_ref, loss_ref):
    # ---- LM head: one MXU matmul + bias, logits written out once -----------
    logits = jnp.dot(x_ref[...], w_ref[...],
                     preferred_element_type=jnp.float32) + b_ref[...]
    logits_ref[...] = logits                               # (rows, V)

    B, T = tgt_ref.shape
    _, D = scores_ref.shape
    rows, V = logits.shape

    # View logits as (B, D, T, V); last-two dims (T, V) = (8, 128) stay on the
    # native sublane/lane tile, so this reshape is layout-preserving.
    lg = logits.reshape(B, D, T, V)

    # ---- vocab log-softmax pieces (keep only shifted + lse, no full logprob)
    m = jnp.max(lg, axis=-1, keepdims=True)                # (B,D,T,1)
    shifted = lg - m                                       # (B,D,T,V)
    lse = jnp.log(jnp.sum(jnp.exp(shifted), axis=-1))      # (B,D,T)

    # ---- target gather via a (B,T,V) mask broadcast over docs --------------
    tgt = tgt_ref[...]                                     # (B, T) int32
    vocab_iota = lax.broadcasted_iota(jnp.int32, (B, T, V), 2)
    tgt_mask = vocab_iota == tgt[:, :, None]               # (B, T, V) bool

    gathered = jnp.sum(jnp.where(tgt_mask[:, None, :, :], shifted, 0.0),
                       axis=-1)                            # (B,D,T)
    sum_shifted = jnp.sum(shifted, axis=-1)                # (B,D,T)

    ll_tok = gathered - lse                                # (B,D,T)
    smooth_tok = sum_shifted - float(V) * lse              # (B,D,T)

    # ---- doc log-softmax over docs axis -------------------------------------
    s = scores_ref[...]                                    # (B, D)
    sm = jnp.max(s, axis=1, keepdims=True)
    ds = s - sm
    doc_lp = ds - jnp.log(jnp.sum(jnp.exp(ds), axis=1, keepdims=True))  # (B,D)

    # rag_logprobs: doc logprob added at the second token position (t == 1)
    is_t1 = (lax.broadcasted_iota(jnp.int32, (1, 1, T), 2) == 1
             ).astype(jnp.float32)                         # (1,1,T)
    ll_tok = ll_tok + is_t1 * doc_lp[:, :, None]
    smooth_tok = smooth_tok + is_t1 * (float(V) * doc_lp[:, :, None])

    # ---- pad masking (built once at (B,T), broadcast over docs) ------------
    pad = (tgt == PAD_TOKEN_ID)[:, None, :]                # (B,1,T)
    ll_tok = jnp.where(pad, 0.0, ll_tok)
    smooth_tok = jnp.where(pad, 0.0, smooth_tok)

    # ---- sum over sequence, logsumexp over docs -----------------------------
    ll_doc = jnp.sum(ll_tok, axis=2)                       # (B, D)
    sm_doc = jnp.sum(smooth_tok, axis=2)                   # (B, D)

    def neg_lsexp(x):                                      # (B, D) -> (B, 1)
        mm = jnp.max(x, axis=1, keepdims=True)
        return -(mm + jnp.log(jnp.sum(jnp.exp(x - mm), axis=1, keepdims=True)))

    # one lane-dense (B, 2) output: col 0 = nll per group, col 1 = smooth
    loss_ref[...] = jnp.concatenate([neg_lsexp(ll_doc), neg_lsexp(sm_doc)],
                                    axis=1)


def reader3_fused(hidden_flat, w_lm, b_lm, doc_scores, target_shifted):
    rows, _ = hidden_flat.shape
    B, _ = target_shifted.shape
    return pl.pallas_call(
        reader3_fused_kernel,
        out_shape=(jax.ShapeDtypeStruct((rows, VOCAB), jnp.float32),
                   jax.ShapeDtypeStruct((B, 2), jnp.float32)),
    )(hidden_flat.astype(jnp.float32),
      w_lm.astype(jnp.float32),
      b_lm.astype(jnp.float32),
      doc_scores.astype(jnp.float32),
      target_shifted.astype(jnp.int32))


# ---------------------------------------------------------------------------
# Reader3.forward (target_ids is not None branch): returns (seq_logits, loss)
# ---------------------------------------------------------------------------
def reader3_forward(params, input_ids, score, target_ids):
    emb = params["embedding"]    # (VOCAB, HIDDEN)
    w_lm = params["lm_w"]        # (HIDDEN, VOCAB)
    b_lm = params["lm_b"]        # (1, VOCAB)

    n_docs = N_DOCS
    # decoder_input_ids = target_ids.repeat_interleave(n_docs, dim=0)
    decoder_input_ids = jnp.repeat(target_ids, n_docs, axis=0)   # (B*n_docs, T)

    # --- stand-in encoder-decoder (glue: embedding gathers / pooling in JAX) --
    enc_emb = jnp.take(emb, input_ids, axis=0)                   # (B*n_docs, S, H)
    enc_pooled = jnp.mean(enc_emb, axis=1)                       # (B*n_docs, H)
    dec_emb = jnp.take(emb, decoder_input_ids, axis=0)           # (B*n_docs, T, H)
    hidden = dec_emb + enc_pooled[:, None, :]                    # (B*n_docs, T, H)

    rows = hidden.shape[0] * hidden.shape[1]

    # --- get_nll target shift (shift-left, append pad) ----------------------
    B, T = target_ids.shape
    target_shifted = jnp.concatenate(
        [target_ids[:, 1:],
         jnp.full((B, 1), PAD_TOKEN_ID, dtype=target_ids.dtype)], axis=1)

    # --- fused LM head + RAG NLL (single pallas_call) -----------------------
    logits_flat, per_group = reader3_fused(
        hidden.reshape(rows, HIDDEN), w_lm, b_lm, score, target_shifted)

    seq_logits = logits_flat.reshape(hidden.shape[0], hidden.shape[1], VOCAB)

    nll_loss = jnp.sum(per_group[:, 0])          # reduce_loss=True
    smooth_loss = jnp.sum(per_group[:, 1])
    eps_i = EPSILON / VOCAB
    loss = (1.0 - EPSILON) * nll_loss + eps_i * smooth_loss
    return seq_logits, loss


# ---------------------------------------------------------------------------
# Pure-JAX reference of the same math (for a sanity check)
# ---------------------------------------------------------------------------
def reference_loss(params, input_ids, score, target_ids):
    emb, w_lm, b_lm = params["embedding"], params["lm_w"], params["lm_b"]
    dec_ids = jnp.repeat(target_ids, N_DOCS, axis=0)
    enc_pooled = jnp.mean(jnp.take(emb, input_ids, axis=0), axis=1)
    hidden = jnp.take(emb, dec_ids, axis=0) + enc_pooled[:, None, :]
    seq_logits = hidden @ w_lm + b_lm

    B, T = target_ids.shape
    tgt = jnp.concatenate(
        [target_ids[:, 1:], jnp.full((B, 1), PAD_TOKEN_ID, target_ids.dtype)], 1)
    seq_lp = jax.nn.log_softmax(seq_logits, axis=-1).reshape(B, N_DOCS, T, VOCAB)
    doc_lp = jax.nn.log_softmax(score, axis=1)[:, :, None, None]
    rag_lp = seq_lp.at[:, :, 1:2, :].add(doc_lp)
    ll = jnp.take_along_axis(rag_lp, tgt[:, None, :, None].repeat(N_DOCS, 1), -1)
    pad_mask = (tgt == PAD_TOKEN_ID)[:, None, :, None].repeat(N_DOCS, 1)
    ll = jnp.where(pad_mask, 0.0, ll)[..., 0].sum(2)
    ll = jax.scipy.special.logsumexp(ll, axis=1)
    return -jnp.sum(ll)


# ---------------------------------------------------------------------------
if __name__ == "__main__":
    key = jax.random.PRNGKey(0)
    k_emb, k_w, k_in, k_tgt, k_sc = jax.random.split(key, 5)

    params = {
        "embedding": (0.02 * jax.random.normal(k_emb, (VOCAB, HIDDEN))).astype(jnp.float32),
        "lm_w": (0.02 * jax.random.normal(k_w, (HIDDEN, VOCAB))).astype(jnp.float32),
        "lm_b": jnp.zeros((1, VOCAB), jnp.float32),
    }

    input_ids = jax.random.randint(k_in, (B_GROUPS * N_DOCS, S_ENC), 1, VOCAB,
                                   dtype=jnp.int32)
    target_ids = jax.random.randint(k_tgt, (B_GROUPS, T_DEC), 1, VOCAB,
                                    dtype=jnp.int32)
    # put a pad token at the end of one target row to exercise pad masking
    target_ids = target_ids.at[0, -1].set(PAD_TOKEN_ID)
    score = jax.random.normal(k_sc, (B_GROUPS, N_DOCS), jnp.float32)

    seq_logits, loss = jax.jit(reader3_forward)(params, input_ids, score, target_ids)
    jax.block_until_ready((seq_logits, loss))

    ref = reference_loss(params, input_ids, score, target_ids)
    assert jnp.allclose(loss, ref, rtol=2e-2, atol=2e-2), (loss, ref)

    print("KERNEL_OK")
</pallas_src>

<mosaic_0001>
module attributes {stable_mosaic.version = 11 : i64} {
  func.func @reader3_fused_kernel(%arg0: memref<48x32xf32, #tpu.memory_space<vmem>>, %arg1: memref<32x128xf32, #tpu.memory_space<vmem>>, %arg2: memref<1x128xf32, #tpu.memory_space<vmem>>, %arg3: memref<2x3xf32, #tpu.memory_space<vmem>>, %arg4: memref<2x8xi32, #tpu.memory_space<vmem>>, %arg5: memref<48x128xf32, #tpu.memory_space<vmem>>, %arg6: memref<2x2xf32, #tpu.memory_space<vmem>>) attributes {dimension_semantics = [], scalar_prefetch = 0 : i64, scratch_operands = 0 : i64, tpu.core_type = #tpu.core_type<tc>} {
    %c0 = arith.constant 0 : index
    %c0_0 = arith.constant 0 : index
    %0 = vector.load %arg0[%c0, %c0_0] : memref<48x32xf32, #tpu.memory_space<vmem>>, vector<48x32xf32>
    %c0_1 = arith.constant 0 : index
    %c0_2 = arith.constant 0 : index
    %1 = vector.load %arg1[%c0_1, %c0_2] : memref<32x128xf32, #tpu.memory_space<vmem>>, vector<32x128xf32>
    %cst = arith.constant dense<0.000000e+00> : vector<48x128xf32>
    %2 = tpu.matmul %0, %1, %cst {dimension_numbers = #tpu.dot_dimension_numbers<[1], [0], [0], [1], [0, 0, 1, 1], [], []>} : vector<48x32xf32>, vector<32x128xf32>, vector<48x128xf32> -> vector<48x128xf32>
    %c0_3 = arith.constant 0 : index
    %c0_4 = arith.constant 0 : index
    %3 = vector.load %arg2[%c0_3, %c0_4] : memref<1x128xf32, #tpu.memory_space<vmem>>, vector<1x128xf32>
    %4 = vector.broadcast %3 : vector<1x128xf32> to vector<48x128xf32>
    %5 = arith.addf %2, %4 : vector<48x128xf32>
    %c0_5 = arith.constant 0 : index
    %c0_6 = arith.constant 0 : index
    %6 = vector.load %arg5[%c0_5, %c0_6] : memref<48x128xf32, #tpu.memory_space<vmem>>, vector<48x128xf32>
    tpu.vector_store %arg5[%c0_5, %c0_6], %5 {strides = array<i32>} : memref<48x128xf32, #tpu.memory_space<vmem>>, vector<48x128xf32>,
    %7 = vector.shape_cast %5 : vector<48x128xf32> to vector<2x3x8x128xf32>
    %cst_7 = arith.constant dense<0xFF800000> : vector<2x3x8xf32>
    %8 = vector.multi_reduction <maximumf>, %7, %cst_7 [3] : vector<2x3x8x128xf32> to vector<2x3x8xf32>
    %9 = vector.shape_cast %8 : vector<2x3x8xf32> to vector<2x3x8x1xf32>
    %10 = vector.broadcast %9 : vector<2x3x8x1xf32> to vector<2x3x8x128xf32>
    %11 = arith.subf %7, %10 : vector<2x3x8x128xf32>
    %12 = math.exp %11 : vector<2x3x8x128xf32>
    %cst_8 = arith.constant dense<0.000000e+00> : vector<2x3x8xf32>
    %13 = vector.multi_reduction <add>, %12, %cst_8 [3] : vector<2x3x8x128xf32> to vector<2x3x8xf32>
    %14 = math.log %13 : vector<2x3x8xf32>
    %c0_9 = arith.constant 0 : index
    %c0_10 = arith.constant 0 : index
    %15 = vector.load %arg4[%c0_9, %c0_10] : memref<2x8xi32, #tpu.memory_space<vmem>>, vector<2x8xi32>
    %16 = tpu.iota {dimensions = array<i32: 2>} : vector<2x8x128xi32>
    %17 = vector.shape_cast %15 : vector<2x8xi32> to vector<2x8x1xi32>
    %18 = vector.broadcast %17 : vector<2x8x1xi32> to vector<2x8x128xi32>
    %19 = arith.cmpi eq, %16, %18 : vector<2x8x128xi32>
    %20 = vector.shape_cast %19 : vector<2x8x128xi1> to vector<2x1x8x128xi1>
    %cst_11 = arith.constant 0.000000e+00 : f32
    %21 = vector.shape_cast %20 : vector<2x1x8x128xi1> to vector<2x1x8x128xi1>
    %22 = vector.broadcast %21 : vector<2x1x8x128xi1> to vector<2x3x8x128xi1>
    %23 = vector.broadcast %cst_11 : f32 to vector<2x3x8x128xf32>
    %24 = arith.select %22, %11, %23 : vector<2x3x8x128xi1>, vector<2x3x8x128xf32>
    %cst_12 = arith.constant dense<0.000000e+00> : vector<2x3x8xf32>
    %25 = vector.multi_reduction <add>, %24, %cst_12 [3] : vector<2x3x8x128xf32> to vector<2x3x8xf32>
    %cst_13 = arith.constant dense<0.000000e+00> : vector<2x3x8xf32>
    %26 = vector.multi_reduction <add>, %11, %cst_13 [3] : vector<2x3x8x128xf32> to vector<2x3x8xf32>
    %27 = arith.subf %25, %14 : vector<2x3x8xf32>
    %cst_14 = arith.constant 1.280000e+02 : f32
    %28 = vector.broadcast %cst_14 : f32 to vector<2x3x8xf32>
    %29 = arith.mulf %28, %14 : vector<2x3x8xf32>
    %30 = arith.subf %26, %29 : vector<2x3x8xf32>
    %c0_15 = arith.constant 0 : index
    %c0_16 = arith.constant 0 : index
    %31 = vector.load %arg3[%c0_15, %c0_16] : memref<2x3xf32, #tpu.memory_space<vmem>>, vector<2x3xf32>
    %cst_17 = arith.constant dense<0xFF800000> : vector<2xf32>
    %32 = vector.multi_reduction <maximumf>, %31, %cst_17 [1] : vector<2x3xf32> to vector<2xf32>
    %33 = vector.shape_cast %32 : vector<2xf32> to vector<2x1xf32>
    %34 = vector.broadcast %33 : vector<2x1xf32> to vector<2x3xf32>
    %35 = arith.subf %31, %34 : vector<2x3xf32>
    %36 = math.exp %35 : vector<2x3xf32>
    %cst_18 = arith.constant dense<0.000000e+00> : vector<2xf32>
    %37 = vector.multi_reduction <add>, %36, %cst_18 [1] : vector<2x3xf32> to vector<2xf32>
    %38 = vector.shape_cast %37 : vector<2xf32> to vector<2x1xf32>
    %39 = math.log %38 : vector<2x1xf32>
    %40 = vector.broadcast %39 : vector<2x1xf32> to vector<2x3xf32>
    %41 = arith.subf %35, %40 : vector<2x3xf32>
    %42 = tpu.iota {dimensions = array<i32: 2>} : vector<1x1x8xi32>
    %c1_i32 = arith.constant 1 : i32
    %43 = vector.broadcast %c1_i32 : i32 to vector<1x1x8xi32>
    %44 = arith.cmpi eq, %42, %43 : vector<1x1x8xi32>
    %45 = arith.extui %44 : vector<1x1x8xi1> to vector<1x1x8xi32>
    %46 = arith.sitofp %45 : vector<1x1x8xi32> to vector<1x1x8xf32>
    %47 = vector.shape_cast %41 : vector<2x3xf32> to vector<2x3x1xf32>
    %48 = vector.broadcast %46 : vector<1x1x8xf32> to vector<2x3x8xf32>
    %49 = vector.broadcast %47 : vector<2x3x1xf32> to vector<2x3x8xf32>
    %50 = arith.mulf %48, %49 : vector<2x3x8xf32>
    %51 = arith.addf %27, %50 : vector<2x3x8xf32>
    %52 = vector.shape_cast %41 : vector<2x3xf32> to vector<2x3x1xf32>
    %cst_19 = arith.constant 1.280000e+02 : f32
    %53 = vector.broadcast %cst_19 : f32 to vector<2x3x1xf32>
    %54 = arith.mulf %53, %52 : vector<2x3x1xf32>
    %55 = vector.broadcast %46 : vector<1x1x8xf32> to vector<2x3x8xf32>
    %56 = vector.broadcast %54 : vector<2x3x1xf32> to vector<2x3x8xf32>
    %57 = arith.mulf %55, %56 : vector<2x3x8xf32>
    %58 = arith.addf %30, %57 : vector<2x3x8xf32>
    %c0_i32 = arith.constant 0 : i32
    %59 = vector.broadcast %c0_i32 : i32 to vector<2x8xi32>
    %60 = arith.cmpi eq, %15, %59 : vector<2x8xi32>
    %61 = vector.shape_cast %60 : vector<2x8xi1> to vector<2x1x8xi1>
    %cst_20 = arith.constant 0.000000e+00 : f32
    %62 = vector.shape_cast %61 : vector<2x1x8xi1> to vector<2x1x8xi1>
    %63 = vector.broadcast %62 : vector<2x1x8xi1> to vector<2x3x8xi1>
    %64 = vector.broadcast %cst_20 : f32 to vector<2x3x8xf32>
    %65 = arith.select %63, %64, %51 : vector<2x3x8xi1>, vector<2x3x8xf32>
    %cst_21 = arith.constant 0.000000e+00 : f32
    %66 = vector.shape_cast %61 : vector<2x1x8xi1> to vector<2x1x8xi1>
    %67 = vector.broadcast %66 : vector<2x1x8xi1> to vector<2x3x8xi1>
    %68 = vector.broadcast %cst_21 : f32 to vector<2x3x8xf32>
    %69 = arith.select %67, %68, %58 : vector<2x3x8xi1>, vector<2x3x8xf32>
    %cst_22 = arith.constant dense<0.000000e+00> : vector<2x3xf32>
    %70 = vector.multi_reduction <add>, %65, %cst_22 [2] : vector<2x3x8xf32> to vector<2x3xf32>
    %cst_23 = arith.constant dense<0.000000e+00> : vector<2x3xf32>
    %71 = vector.multi_reduction <add>, %69, %cst_23 [2] : vector<2x3x8xf32> to vector<2x3xf32>
    %cst_24 = arith.constant dense<0xFF800000> : vector<2xf32>
    %72 = vector.multi_reduction <maximumf>, %70, %cst_24 [1] : vector<2x3xf32> to vector<2xf32>
    %73 = vector.shape_cast %72 : vector<2xf32> to vector<2x1xf32>
    %74 = vector.broadcast %73 : vector<2x1xf32> to vector<2x3xf32>
    %75 = arith.subf %70, %74 : vector<2x3xf32>
    %76 = math.exp %75 : vector<2x3xf32>
    %cst_25 = arith.constant dense<0.000000e+00> : vector<2xf32>
    %77 = vector.multi_reduction <add>, %76, %cst_25 [1] : vector<2x3xf32> to vector<2xf32>
    %78 = vector.shape_cast %77 : vector<2xf32> to vector<2x1xf32>
    %79 = math.log %78 : vector<2x1xf32>
    %80 = arith.addf %73, %79 : vector<2x1xf32>
    %cst_26 = arith.constant 0.000000e+00 : f32
    %81 = vector.broadcast %cst_26 : f32 to vector<2x1xf32>
    %82 = arith.subf %81, %80 : vector<2x1xf32>
    %cst_27 = arith.constant dense<0xFF800000> : vector<2xf32>
    %83 = vector.multi_reduction <maximumf>, %71, %cst_27 [1] : vector<2x3xf32> to vector<2xf32>
    %84 = vector.shape_cast %83 : vector<2xf32> to vector<2x1xf32>
    %85 = vector.broadcast %84 : vector<2x1xf32> to vector<2x3xf32>
    %86 = arith.subf %71, %85 : vector<2x3xf32>
    %87 = math.exp %86 : vector<2x3xf32>
    %cst_28 = arith.constant dense<0.000000e+00> : vector<2xf32>
    %88 = vector.multi_reduction <add>, %87, %cst_28 [1] : vector<2x3xf32> to vector<2xf32>
    %89 = vector.shape_cast %88 : vector<2xf32> to vector<2x1xf32>
    %90 = math.log %89 : vector<2x1xf32>
    %91 = arith.addf %84, %90 : vector<2x1xf32>
    %cst_29 = arith.constant 0.000000e+00 : f32
    %92 = vector.broadcast %cst_29 : f32 to vector<2x1xf32>
    %93 = arith.subf %92, %91 : vector<2x1xf32>
    %94 = tpu.concatenate %82, %93 in 1 : vector<2x1xf32>, vector<2x1xf32> -> vector<2x2xf32>
    %c0_30 = arith.constant 0 : index
    %c0_31 = arith.constant 0 : index
    %95 = vector.load %arg6[%c0_30, %c0_31] : memref<2x2xf32, #tpu.memory_space<vmem>>, vector<2x2xf32>
    tpu.vector_store %arg6[%c0_30, %c0_31], %94 {strides = array<i32>} : memref<2x2xf32, #tpu.memory_space<vmem>>, vector<2x2xf32>,
    return
  }
}

</mosaic_0001>

<llo_original>
// kernel: reader3_forward.1
$region0: #{reader3_forward.1}
  #allocation0 [shape = 'u32[]', space=smem, size = 0x4, offset = 0x4, fixed_abs, tag = 'smem constant byte address 0x4 - core index']
  #allocation1 [shape = 'u32[144,128]{1,0:T(1,128)}', space=vmem, size = 0x12000, scoped, tag = 'internal scratch']
  %s0 = inlined_call_operand.vmem [shape: f32[48,32], index: 0, kind: input, shape index: {}]
  %s1 = inlined_call_operand.vmem [shape: f32[32,128], index: 1, kind: input, shape index: {}]
  %s2 = inlined_call_operand.vmem [shape: f32[1,128], index: 2, kind: input, shape index: {}]
  %s3 = inlined_call_operand.vmem [shape: f32[2,3], index: 3, kind: input, shape index: {}]
  %s4 = inlined_call_operand.vmem [shape: s32[2,8], index: 4, kind: input, shape index: {}]
  %s5 = inlined_call_operand.hbm [shape: f32[48,128], index: 5, kind: output, shape index: {0}]
  %s6 = inlined_call_operand.vmem [shape: f32[2,2], index: 6, kind: output, shape index: {1}]
  %7 = xla_tuple %s5, %s6
  %s8 = sld [smem:[#allocation0]]
  $region38: #{reader3_forward.1} parent=0
    _
  %s10 = ssub.s32 1, %s8
  %s11 = scalar_select 0, %s10, %s8
  $region1: #{reader3_forward.1} parent=0
    #allocation2 [shape = 'u8[24576]{0}', space=vmem, size = 0x6000, scoped, tag = 'output window, operand 0, single buffered']
    #allocation3 [shape = 's32[1]{0}', space=sflag, size = 0x4, scoped, tag = 'scoped memory for reader3_forward.1']
    %12 = vsyncpa [#allocation3], 0
    // Predicated region
    $region2: #{reader3_forward.1} parent=1 // pred_check
      _
    $region3: #{reader3_forward.1} parent=1 // pred_check_branch
      %14 = sbr.rel (0) target = $region5
    $region4: #{reader3_forward.1} parent=1 // pred_region
      _
    $region5: #{reader3_forward.1} parent=1 // pred_fallthru
      _
    // Predicated region
    $region6: #{reader3_forward.1} parent=1 // pred_check
      _
    $region7: #{reader3_forward.1} parent=1 // pred_check_branch
      %16 = sbr.rel (0) target = $region9
    $region8: #{reader3_forward.1} parent=1 // pred_region
      _
    $region9: #{reader3_forward.1} parent=1 // pred_fallthru
      _
    // Predicated region
    $region10: #{reader3_forward.1} parent=1 // pred_check
      _
    $region11: #{reader3_forward.1} parent=1 // pred_check_branch
      %18 = sbr.rel (0) target = $region13
    $region12: #{reader3_forward.1} parent=1 // pred_region
      _
    $region13: #{reader3_forward.1} parent=1 // pred_fallthru
      _
    // Predicated region
    $region14: #{reader3_forward.1} parent=1 // pred_check
      _
    $region15: #{reader3_forward.1} parent=1 // pred_check_branch
      %20 = sbr.rel (0) target = $region17
    $region16: #{reader3_forward.1} parent=1 // pred_region
      _
    $region17: #{reader3_forward.1} parent=1 // pred_fallthru
      _
    // Predicated region
    $region18: #{reader3_forward.1} parent=1 // pred_check
      _
    $region19: #{reader3_forward.1} parent=1 // pred_check_branch
      %22 = sbr.rel (0) target = $region21
    $region20: #{reader3_forward.1} parent=1 // pred_region
      _
    $region21: #{reader3_forward.1} parent=1 // pred_fallthru
      _
    %v23 = vld [vmem:[%s0] sm:$0xff]
    %v24 = vld [vmem:[%s0 + $0x8] sm:$0xff]
    %v25 = vld [vmem:[%s0 + $0x10] sm:$0xff]
    %v26 = vld [vmem:[%s0 + $0x18] sm:$0xff]
    %v27 = vld [vmem:[%s0 + $0x20] sm:$0xff]
    %v28 = vld [vmem:[%s0 + $0x28] sm:$0xff]
    %v29 = vld [vmem:[%s1] sm:$0xff]
    %v30 = vld [vmem:[%s1 + $0x8] sm:$0xff]
    %v31 = vld [vmem:[%s1 + $0x10] sm:$0xff]
    %v32 = vld [vmem:[%s1 + $0x18] sm:$0xff]
    %v33 = vld [vmem:[%s2] sm:$0x1]
    %v35 = vlaneseq
    %v36 = vshrl.u32 %v35, 7
    %v37 = vsub.s32 0, %v36
    %v38 = vrot.slane %v33, %v37
    %vm40 = vcmask 261120
    %v42 = vsel %vm40, %v23, 0
    %v45 = vsel %vm40, %v24, 0
    %v48 = vsel %vm40, %v25, 0
    %v51 = vsel %vm40, %v26, 0
    %v54 = vsel %vm40, %v27, 0
    %v57 = vsel %vm40, %v28, 0
    %59 = vmatprep.subr.mxu0 0.0
    %60 = vmatpush1.msra.mxu0 %v29
    %61 = vmatprep.subr.mxu0 0.0
    %62 = vmatpush1.msra.mxu0 %v30
    %63 = vmatprep.subr.mxu0 0.0
    %64 = vmatpush1.msra.mxu0 %v31
    %65 = vmatprep.subr.mxu0 0.0
    %66 = vmatpush1.msra.mxu0 %v32
    %67 = vmatprep.subr.mxu0 0.0
    %68 = vmatpush1.msra.mxu0 0.0
    %69 = vmatprep.subr.mxu0 0.0
    %70 = vmatpush1.msra.mxu0 0.0
    %71 = vmatprep.subr.mxu0 0.0
    %72 = vmatpush1.msra.mxu0 0.0
    %73 = vmatprep.subr.mxu0 0.0
    %74 = vmatpush1.msra.mxu0 0.0
    %75 = vmatprep.subr.mxu0 0.0
    %76 = vmatpush1.msra.mxu0 0.0
    %77 = vmatprep.subr.mxu0 0.0
    %78 = vmatpush1.msra.mxu0 0.0
    %79 = vmatprep.subr.mxu0 0.0
    %80 = vmatpush1.msra.mxu0 0.0
    %81 = vmatprep.subr.mxu0 0.0
    %82 = vmatpush1.msra.mxu0 0.0
    %83 = vmatprep.subr.mxu0 0.0
    %84 = vmatpush1.msra.mxu0 0.0
    %85 = vmatprep.subr.mxu0 0.0
    %86 = vmatpush1.msra.mxu0 0.0
    %87 = vmatprep.subr.mxu0 0.0
    %88 = vmatpush1.msra.mxu0 0.0
    %89 = vmatprep.subr.mxu0 0.0
    %90 = vmatpush1.msra.mxu0 0.0
    %91 = vmatprep.subr.mxu0 0.0
    %92 = vmatpush1.msra.mxu0 0.0
    %93 = vmatprep.subr.mxu0 0.0
    %94 = vmatpush1.msra.mxu0 0.0
    %95 = vmatprep.subr.mxu0 0.0
    %96 = vmatpush1.msra.mxu0 0.0
    %97 = vmatprep.subr.mxu0 0.0
    %98 = vmatpush1.msra.mxu0 0.0
    %99 = vmatprep.subr.mxu0 0.0
    %100 = vmatpush1.msra.mxu0 0.0
    %101 = vmatprep.subr.mxu0 0.0
    %102 = vmatpush1.msra.mxu0 0.0
    %103 = vmatprep.subr.mxu0 0.0
    %104 = vmatpush1.msra.mxu0 0.0
    %105 = vmatprep.subr.mxu0 0.0
    %106 = vmatpush1.msra.mxu0 0.0
    %107 = vmatprep.subr.mxu0 0.0
    %108 = vmatpush1.msra.mxu0 0.0
    %109 = vmatprep.subr.mxu0 0.0
    %110 = vmatpush1.msra.mxu0 0.0
    %111 = vmatprep.subr.mxu0 0.0
    %112 = vmatpush1.msra.mxu0 0.0
    %113 = vmatprep.subr.mxu0 0.0
    %114 = vmatpush1.msra.mxu0 0.0
    %115 = vmatprep.subr.mxu0 0.0
    %116 = vmatpush1.msra.mxu0 0.0
    %117 = vmatprep.subr.mxu0 0.0
    %118 = vmatpush1.msra.mxu0 0.0
    %119 = vmatprep.subr.mxu0 0.0
    %120 = vmatpush1.msra.mxu0 0.0
    %121 = vmatprep.subr.mxu0 0.0
    %122 = vmatpush1.msra.mxu0 0.0
    %123 = vmatprep.mubr.f32.mxu0 0.0
    %124 = vmatmul.mubr.f32.gmra.mrb[0].mxu0 %v42
    %v125 = vpop.f32.mrb[0].mxu0
    %v126 = vadd.f32 %v38, %v125
    %v127 = vpop.f32.mrb[0].mxu0
    %128 = vmatprep.mubr.f32.mxu0 0.0
    %129 = vmatmul.mubr.f32.gmra.mrb[0].mxu0 %v45
    %v130 = vpop.f32.mrb[0].mxu0
    %v131 = vadd.f32 %v38, %v130
    %v132 = vpop.f32.mrb[0].mxu0
    %133 = vmatprep.mubr.f32.mxu0 0.0
    %134 = vmatmul.mubr.f32.gmra.mrb[0].mxu0 %v48
    %v135 = vpop.f32.mrb[0].mxu0
    %v136 = vadd.f32 %v38, %v135
    %v137 = vpop.f32.mrb[0].mxu0
    %138 = vmatprep.mubr.f32.mxu0 0.0
    %139 = vmatmul.mubr.f32.gmra.mrb[0].mxu0 %v51
    %v140 = vpop.f32.mrb[0].mxu0
    %v141 = vadd.f32 %v38, %v140
    %v142 = vpop.f32.mrb[0].mxu0
    %143 = vmatprep.mubr.f32.mxu0 0.0
    %144 = vmatmul.mubr.f32.gmra.mrb[0].mxu0 %v54
    %v145 = vpop.f32.mrb[0].mxu0
    %v146 = vadd.f32 %v38, %v145
    %v147 = vpop.f32.mrb[0].mxu0
    %148 = vmatprep.mubr.f32.mxu0 0.0
    %149 = vmatmul.mubr.f32.gmra.mrb[0].mxu0 %v57
    %v150 = vpop.f32.mrb[0].mxu0
    %v151 = vadd.f32 %v38, %v150
    %v152 = vpop.f32.mrb[0].mxu0
    %153 = vdwg.mxu0
    %154 = vst [vmem:[#allocation2] sm:$0xff] %v126
    %155 = vst [vmem:[#allocation2 + $0x8] sm:$0xff] %v131
    %156 = vst [vmem:[#allocation2 + $0x10] sm:$0xff] %v136
    %157 = vst [vmem:[#allocation2 + $0x18] sm:$0xff] %v141
    %158 = vst [vmem:[#allocation2 + $0x20] sm:$0xff] %v146
    %159 = vst [vmem:[#allocation2 + $0x28] sm:$0xff] %v151
    %160 = vmax.xlane.f32.xlu0 %v126
    %v161 = vpop.xlane.xlu0 %160
    %162 = vmax.xlane.f32.xlu0 %v131
    %v163 = vpop.xlane.xlu0 %162
    %164 = vmax.xlane.f32.xlu0 %v136
    %v165 = vpop.xlane.xlu0 %164
    %166 = vmax.xlane.f32.xlu0 %v141
    %v167 = vpop.xlane.xlu0 %166
    %168 = vmax.xlane.f32.xlu0 %v146
    %v169 = vpop.xlane.xlu0 %168
    %170 = vmax.xlane.f32.xlu0 %v151
    %v171 = vpop.xlane.xlu0 %170
    %v172 = vsub.f32 %v126, %v161
    %v173 = vsub.f32 %v131, %v163
    %v174 = vsub.f32 %v136, %v165
    %v175 = vsub.f32 %v141, %v167
    %v176 = vsub.f32 %v146, %v169
    %v177 = vsub.f32 %v151, %v171
    %v178 = vmul.f32 %v172, 1.442695
    %v179 = vpow.pop %v178
    %v180 = vmul.f32 %v173, 1.442695
    %v181 = vpow.pop %v180
    %v182 = vmul.f32 %v174, 1.442695
    %v183 = vpow.pop %v182
    %v184 = vmul.f32 %v175, 1.442695
    %v185 = vpow.pop %v184
    %v186 = vmul.f32 %v176, 1.442695
    %v187 = vpow.pop %v186
    %v188 = vmul.f32 %v177, 1.442695
    %v189 = vpow.pop %v188
    %190 = vadd.xlane.f32.xlu0 %v179
    %v191 = vpop.xlane.xlu0 %190
    %192 = vadd.xlane.f32.xlu0 %v181
    %v193 = vpop.xlane.xlu0 %192
    %194 = vadd.xlane.f32.xlu0 %v183
    %v195 = vpop.xlane.xlu0 %194
    %196 = vadd.xlane.f32.xlu0 %v185
    %v197 = vpop.xlane.xlu0 %196
    %198 = vadd.xlane.f32.xlu0 %v187
    %v199 = vpop.xlane.xlu0 %198
    %200 = vadd.xlane.f32.xlu0 %v189
    %v201 = vpop.xlane.xlu0 %200
    %v202 = vlog2.pop %v191
    %v203 = vmul.f32 %v202, 0.6931472
    %v204 = vlog2.pop %v193
    %v205 = vmul.f32 %v204, 0.6931472
    %v206 = vlog2.pop %v195
    %v207 = vmul.f32 %v206, 0.6931472
    %v208 = vlog2.pop %v197
    %v209 = vmul.f32 %v208, 0.6931472
    %v210 = vlog2.pop %v199
    %v211 = vmul.f32 %v210, 0.6931472
    %v212 = vlog2.pop %v201
    %v213 = vmul.f32 %v212, 0.6931472
    %v214 = vld [vmem:[%s4] sm:$0x3]
    %v215 = vlaneseq
    %v216 = vand.u32 %v215, 127
    %v217 = vlaneseq
    %v218 = vshrl.u32 %v217, 7
    %v219 = vsub.s32 0, %v218
    %v220 = vrot.slane %v214, %v219
    %222 = vbcast.lane.b32.xlu0 %v220, 256
    %v223 = vpop.permute.xlu0 %222
    %v224 = vlaneseq
    %v225 = vshrl.u32 %v224, 7
    %v226 = vsub.s32 1, %v225
    %v227 = vrot.slane %v214, %v226
    %229 = vbcast.lane.b32.xlu0 %v227, 256
    %v230 = vpop.permute.xlu0 %229
    %vm231 = vcmp.eq.s32.totalorder %v216, %v223
    %vm232 = vcmp.eq.s32.totalorder %v216, %v230
    %v233 = vsel %vm231, 1, 0
    %v234 = vsel %vm232, 1, 0
    %vm235 = vcmp.eq.s32.totalorder %v233, 1
    %vm236 = vcmp.eq.s32.totalorder %v234, 1
    %v237 = vsel %vm235, %v172, 0.0
    %v238 = vsel %vm235, %v173, 0.0
    %v239 = vsel %vm235, %v174, 0.0
    %v240 = vsel %vm236, %v175, 0.0
    %v241 = vsel %vm236, %v176, 0.0
    %v242 = vsel %vm236, %v177, 0.0
    %243 = vadd.xlane.f32.xlu0 %v237
    %v244 = vpop.xlane.xlu0 %243
    %245 = vadd.xlane.f32.xlu0 %v238
    %v246 = vpop.xlane.xlu0 %245
    %247 = vadd.xlane.f32.xlu0 %v239
    %v248 = vpop.xlane.xlu0 %247
    %249 = vadd.xlane.f32.xlu0 %v240
    %v250 = vpop.xlane.xlu0 %249
    %251 = vadd.xlane.f32.xlu0 %v241
    %v252 = vpop.xlane.xlu0 %251
    %253 = vadd.xlane.f32.xlu0 %v242
    %v254 = vpop.xlane.xlu0 %253
    %255 = vadd.xlane.f32.xlu0 %v172
    %v256 = vpop.xlane.xlu0 %255
    %257 = vadd.xlane.f32.xlu0 %v173
    %v258 = vpop.xlane.xlu0 %257
    %259 = vadd.xlane.f32.xlu0 %v174
    %v260 = vpop.xlane.xlu0 %259
    %261 = vadd.xlane.f32.xlu0 %v175
    %v262 = vpop.xlane.xlu0 %261
    %263 = vadd.xlane.f32.xlu0 %v176
    %v264 = vpop.xlane.xlu0 %263
    %265 = vadd.xlane.f32.xlu0 %v177
    %v266 = vpop.xlane.xlu0 %265
    %v267 = vsub.f32 %v244, %v203
    %v268 = vsub.f32 %v246, %v205
    %v269 = vsub.f32 %v248, %v207
    %v270 = vsub.f32 %v250, %v209
    %v271 = vsub.f32 %v252, %v211
    %v272 = vsub.f32 %v254, %v213
    %v273 = vmul.f32 %v203, 128.0
    %v274 = vmul.f32 %v205, 128.0
    %v275 = vmul.f32 %v207, 128.0
    %v276 = vmul.f32 %v209, 128.0
    %v277 = vmul.f32 %v211, 128.0
    %v278 = vmul.f32 %v213, 128.0
    %v279 = vsub.f32 %v256, %v273
    %v280 = vsub.f32 %v258, %v274
    %v281 = vsub.f32 %v260, %v275
    %v282 = vsub.f32 %v262, %v276
    %v283 = vsub.f32 %v264, %v277
    %v284 = vsub.f32 %v266, %v278
    %v285 = vld [vmem:[%s3] sm:$0x3]
    %vm286 = vcmask 17408
    %v287 = vsel %vm286, %v285, -inf
    %288 = vmax.xlane.f32.xlu0 %v287
    %v289 = vpop.xlane.xlu0 %288
    %v290 = vsub.f32 %v285, %v289
    %v291 = vmul.f32 %v290, 1.442695
    %v292 = vpow.pop %v291
    %v293 = vsel %vm286, %v292, 0.0
    %294 = vadd.xlane.f32.xlu0 %v293
    %v295 = vpop.xlane.xlu0 %294
    %v296 = vlog2.pop %v295
    %v297 = vmul.f32 %v296, 0.6931472
    %v298 = vsub.f32 %v290, %v297
    %vm299 = vcmp.eq.s32.totalorder %v216, 1
    %v300 = vsel %vm299, 1, 0
    %v301 = vcvt.s32.f32 %v300
    %v302 = vlaneseq
    %v303 = vshrl.u32 %v302, 7
    %v304 = vsub.s32 0, %v303
    %v305 = vrot.slane %v298, %v304
    %307 = vbcast.lane.b32.xlu0 %v305, 256
    %v308 = vpop.permute.xlu0 %307
    %v309 = vlaneseq
    %v310 = vshrl.u32 %v309, 7
    %v311 = vsub.s32 1, %v310
    %v312 = vrot.slane %v298, %v311
    %314 = vbcast.lane.b32.xlu0 %v312, 256
    %v315 = vpop.permute.xlu0 %314
    %v316 = vmul.f32 %v301, %v308
    %v317 = vmul.f32 %v301, %v315
    %v320 = vlaneseq
    %v321 = vshrl.u32 %v320, 7
    %v322 = vsub.s32 0, %v321
    %v323 = vrot.slane %v316, %v322
    %325 = vbcast.lane.b32.xlu0 %v323, 256
    %v326 = vpop.permute.xlu0 %325
    %v327 = vlaneseq
    %v328 = vshrl.u32 %v327, 7
    %v329 = vsub.s32 1, %v328
    %v330 = vrot.slane %v316, %v329
    %332 = vbcast.lane.b32.xlu0 %v330, 256
    %v333 = vpop.permute.xlu0 %332
    %v334 = vlaneseq
    %v335 = vshrl.u32 %v334, 7
    %v336 = vsub.s32 2, %v335
    %v337 = vrot.slane %v316, %v336
    %339 = vbcast.lane.b32.xlu0 %v337, 256
    %v340 = vpop.permute.xlu0 %339
    %v341 = vlaneseq
    %v342 = vshrl.u32 %v341, 7
    %v343 = vsub.s32 0, %v342
    %v344 = vrot.slane %v317, %v343
    %346 = vbcast.lane.b32.xlu0 %v344, 256
    %v347 = vpop.permute.xlu0 %346
    %v348 = vlaneseq
    %v349 = vshrl.u32 %v348, 7
    %v350 = vsub.s32 1, %v349
    %v351 = vrot.slane %v317, %v350
    %353 = vbcast.lane.b32.xlu0 %v351, 256
    %v354 = vpop.permute.xlu0 %353
    %v355 = vlaneseq
    %v356 = vshrl.u32 %v355, 7
    %v357 = vsub.s32 2, %v356
    %v358 = vrot.slane %v317, %v357
    %360 = vbcast.lane.b32.xlu0 %v358, 256
    %v361 = vpop.permute.xlu0 %360
    %v368 = vadd.f32 %v267, %v326
    %v369 = vadd.f32 %v268, %v333
    %v370 = vadd.f32 %v269, %v340
    %v371 = vadd.f32 %v270, %v347
    %v372 = vadd.f32 %v271, %v354
    %v373 = vadd.f32 %v272, %v361
    %v374 = vmul.f32 %v308, 128.0
    %v375 = vmul.f32 %v315, 128.0
    %v376 = vmul.f32 %v301, %v374
    %v377 = vmul.f32 %v301, %v375
    %v380 = vlaneseq
    %v381 = vshrl.u32 %v380, 7
    %v382 = vsub.s32 0, %v381
    %v383 = vrot.slane %v376, %v382
    %385 = vbcast.lane.b32.xlu0 %v383, 256
    %v386 = vpop.permute.xlu0 %385
    %v387 = vlaneseq
    %v388 = vshrl.u32 %v387, 7
    %v389 = vsub.s32 1, %v388
    %v390 = vrot.slane %v376, %v389
    %392 = vbcast.lane.b32.xlu0 %v390, 256
    %v393 = vpop.permute.xlu0 %392
    %v394 = vlaneseq
    %v395 = vshrl.u32 %v394, 7
    %v396 = vsub.s32 2, %v395
    %v397 = vrot.slane %v376, %v396
    %399 = vbcast.lane.b32.xlu0 %v397, 256
    %v400 = vpop.permute.xlu0 %399
    %v401 = vlaneseq
    %v402 = vshrl.u32 %v401, 7
    %v403 = vsub.s32 0, %v402
    %v404 = vrot.slane %v377, %v403
    %406 = vbcast.lane.b32.xlu0 %v404, 256
    %v407 = vpop.permute.xlu0 %406
    %v408 = vlaneseq
    %v409 = vshrl.u32 %v408, 7
    %v410 = vsub.s32 1, %v409
    %v411 = vrot.slane %v377, %v410
    %413 = vbcast.lane.b32.xlu0 %v411, 256
    %v414 = vpop.permute.xlu0 %413
    %v415 = vlaneseq
    %v416 = vshrl.u32 %v415, 7
    %v417 = vsub.s32 2, %v416
    %v418 = vrot.slane %v377, %v417
    %420 = vbcast.lane.b32.xlu0 %v418, 256
    %v421 = vpop.permute.xlu0 %420
    %v428 = vadd.f32 %v279, %v386
    %v429 = vadd.f32 %v280, %v393
    %v430 = vadd.f32 %v281, %v400
    %v431 = vadd.f32 %v282, %v407
    %v432 = vadd.f32 %v283, %v414
    %v433 = vadd.f32 %v284, %v421
    %vm434 = vcmp.eq.s32.totalorder %v214, 0
    %v435 = vsel %vm434, 1, 0
    %v437 = vunpack.c.l.s4 1966171168
    %v438 = vunpack.c.0.s8 %v437
    %v439 = vlaneseq
    %v440 = vshrl.u32 %v439, 7
    %v441 = vsub.s32 %v438, %v440
    %v442 = vrot.slane %v435, %v441
    %v443 = vcombine.high %v442, %v442
    %v445 = vunpack.c.l.s4 1966171168
    %v446 = vunpack.c.0.s8 %v445
    %v447 = vlaneseq
    %v448 = vshrl.u32 %v447, 7
    %v449 = vsub.s32 %v446, %v448
    %v450 = vrot.slane %v442, %v449
    %v452 = vunpack.c.l.s4 1966171168
    %v453 = vunpack.c.0.s8 %v452
    %v454 = vlaneseq
    %v455 = vshrl.u32 %v454, 7
    %v456 = vsub.s32 %v453, %v455
    %v457 = vrot.slane %v443, %v456
    %vm458 = vcmp.ne.s32.totalorder %v450, 0
    %vm459 = vcmp.ne.s32.totalorder %v457, 0
    %v460 = vsel %vm458, 1, 0
    %v461 = vsel %vm459, 1, 0
    %v462 = vlaneseq
    %v463 = vshrl.u32 %v462, 7
    %v464 = vsub.s32 0, %v463
    %v465 = vrot.slane %v460, %v464
    %v466 = vlaneseq
    %v467 = vshrl.u32 %v466, 7
    %v468 = vsub.s32 0, %v467
    %v469 = vrot.slane %v461, %v468
    %vm470 = vcmp.eq.s32.totalorder %v465, 1
    %vm471 = vcmp.eq.s32.totalorder %v469, 1
    %478 = vset.pattern.permute.xlu0 0
    %479 = vperm.xlu0 %478, %v368
    %v480 = vpop.permute.xlu0 %479
    %481 = vset.pattern.permute.xlu0 0
    %482 = vperm.xlu0 %481, %v369
    %v483 = vpop.permute.xlu0 %482
    %484 = vset.pattern.permute.xlu0 0
    %485 = vperm.xlu0 %484, %v370
    %v486 = vpop.permute.xlu0 %485
    %487 = vset.pattern.permute.xlu0 0
    %488 = vperm.xlu0 %487, %v371
    %v489 = vpop.permute.xlu0 %488
    %490 = vset.pattern.permute.xlu0 0
    %491 = vperm.xlu0 %490, %v372
    %v492 = vpop.permute.xlu0 %491
    %493 = vset.pattern.permute.xlu0 0
    %494 = vperm.xlu0 %493, %v373
    %v495 = vpop.permute.xlu0 %494
    %v496 = vlaneseq
    %v497 = vshrl.u32 %v496, 7
    %v498 = vsub.s32 %v216, %v497
    %v499 = vrot.slane %v480, %v498
    %v500 = vlaneseq
    %v501 = vshrl.u32 %v500, 7
    %v502 = vsub.s32 %v216, %v501
    %v503 = vrot.slane %v483, %v502
    %v504 = vlaneseq
    %v505 = vshrl.u32 %v504, 7
    %v506 = vsub.s32 %v216, %v505
    %v507 = vrot.slane %v486, %v506
    %v508 = vlaneseq
    %v509 = vshrl.u32 %v508, 7
    %v510 = vsub.s32 %v216, %v509
    %v511 = vrot.slane %v489, %v510
    %v512 = vlaneseq
    %v513 = vshrl.u32 %v512, 7
    %v514 = vsub.s32 %v216, %v513
    %v515 = vrot.slane %v492, %v514
    %v516 = vlaneseq
    %v517 = vshrl.u32 %v516, 7
    %v518 = vsub.s32 %v216, %v517
    %v519 = vrot.slane %v495, %v518
    %vm520 = vcmask 1041409
    %v521 = vsel %vm520, %v503, %v499
    %vm522 = vcmask 1042434
    %v523 = vsel %vm522, %v507, %v521
    %v524 = vsel %vm520, %v515, %v511
    %v525 = vsel %vm522, %v519, %v524
    %v528 = vsel %vm470, 0.0, %v523
    %v529 = vsel %vm471, 0.0, %v525
    %536 = vset.pattern.permute.xlu0 0
    %537 = vperm.xlu0 %536, %v428
    %v538 = vpop.permute.xlu0 %537
    %539 = vset.pattern.permute.xlu0 0
    %540 = vperm.xlu0 %539, %v429
    %v541 = vpop.permute.xlu0 %540
    %542 = vset.pattern.permute.xlu0 0
    %543 = vperm.xlu0 %542, %v430
    %v544 = vpop.permute.xlu0 %543
    %545 = vset.pattern.permute.xlu0 0
    %546 = vperm.xlu0 %545, %v431
    %v547 = vpop.permute.xlu0 %546
    %548 = vset.pattern.permute.xlu0 0
    %549 = vperm.xlu0 %548, %v432
    %v550 = vpop.permute.xlu0 %549
    %551 = vset.pattern.permute.xlu0 0
    %552 = vperm.xlu0 %551, %v433
    %v553 = vpop.permute.xlu0 %552
    %v554 = vlaneseq
    %v555 = vshrl.u32 %v554, 7
    %v556 = vsub.s32 %v216, %v555
    %v557 = vrot.slane %v538, %v556
    %v558 = vlaneseq
    %v559 = vshrl.u32 %v558, 7
    %v560 = vsub.s32 %v216, %v559
    %v561 = vrot.slane %v541, %v560
    %v562 = vlaneseq
    %v563 = vshrl.u32 %v562, 7
    %v564 = vsub.s32 %v216, %v563
    %v565 = vrot.slane %v544, %v564
    %v566 = vlaneseq
    %v567 = vshrl.u32 %v566, 7
    %v568 = vsub.s32 %v216, %v567
    %v569 = vrot.slane %v547, %v568
    %v570 = vlaneseq
    %v571 = vshrl.u32 %v570, 7
    %v572 = vsub.s32 %v216, %v571
    %v573 = vrot.slane %v550, %v572
    %v574 = vlaneseq
    %v575 = vshrl.u32 %v574, 7
    %v576 = vsub.s32 %v216, %v575
    %v577 = vrot.slane %v553, %v576
    %v578 = vsel %vm520, %v561, %v557
    %v579 = vsel %vm522, %v565, %v578
    %v580 = vsel %vm520, %v573, %v569
    %v581 = vsel %vm522, %v577, %v580
    %v584 = vsel %vm470, 0.0, %v579
    %v585 = vsel %vm471, 0.0, %v581
    %vm586 = vcmask 59392
    %v587 = vsel %vm586, %v528, 0.0
    %588 = vadd.xlane.f32.xlu0 %v587
    %v589 = vpop.xlane.xlu0 %588
    %v590 = vsel %vm586, %v529, 0.0
    %591 = vadd.xlane.f32.xlu0 %v590
    %v592 = vpop.xlane.xlu0 %591
    %v593 = vsel %vm586, %v584, 0.0
    %594 = vadd.xlane.f32.xlu0 %v593
    %v595 = vpop.xlane.xlu0 %594
    %v596 = vsel %vm586, %v585, 0.0
    %597 = vadd.xlane.f32.xlu0 %v596
    %v598 = vpop.xlane.xlu0 %597
    %v601 = vlaneseq
    %v602 = vshrl.u32 %v601, 7
    %v603 = vsub.s32 %v216, %v602
    %v604 = vrot.slane %v589, %v603
    %v605 = vlaneseq
    %v606 = vshrl.u32 %v605, 7
    %v607 = vsub.s32 %v216, %v606
    %v608 = vrot.slane %v592, %v607
    %v609 = vsel %vm520, %v608, %v604
    %v611 = vsel %vm286, %v609, -inf
    %612 = vmax.xlane.f32.xlu0 %v611
    %v613 = vpop.xlane.xlu0 %612
    %v615 = vlaneseq
    %v616 = vshrl.u32 %v615, 7
    %v617 = vsub.s32 0, %v616
    %v618 = vrot.slane %v613, %v617
    %v619 = vlaneseq
    %v620 = vshrl.u32 %v619, 7
    %v621 = vsub.s32 1, %v620
    %v622 = vrot.slane %v613, %v621
    %v625 = vsub.f32 %v589, %v618
    %v626 = vsub.f32 %v592, %v622
    %v627 = vmul.f32 %v625, 1.442695
    %v628 = vpow.pop %v627
    %v629 = vmul.f32 %v626, 1.442695
    %v630 = vpow.pop %v629
    %633 = vset.pattern.permute.xlu0 0
    %634 = vperm.xlu0 %633, %v628
    %v635 = vpop.permute.xlu0 %634
    %636 = vset.pattern.permute.xlu0 0
    %637 = vperm.xlu0 %636, %v630
    %v638 = vpop.permute.xlu0 %637
    %v639 = vlaneseq
    %v640 = vshrl.u32 %v639, 7
    %v641 = vsub.s32 %v216, %v640
    %v642 = vrot.slane %v635, %v641
    %v643 = vlaneseq
    %v644 = vshrl.u32 %v643, 7
    %v645 = vsub.s32 %v216, %v644
    %v646 = vrot.slane %v638, %v645
    %v647 = vsel %vm520, %v646, %v642
    %v649 = vsel %vm286, %v647, 0.0
    %650 = vadd.xlane.f32.xlu0 %v649
    %v651 = vpop.xlane.xlu0 %650
    %v652 = vlog2.pop %v651
    %v653 = vmul.f32 %v652, 0.6931472
    %v654 = vadd.f32 %v613, %v653
    %v655 = vsub.f32 0.0, %v654
    %v658 = vlaneseq
    %v659 = vshrl.u32 %v658, 7
    %v660 = vsub.s32 %v216, %v659
    %v661 = vrot.slane %v595, %v660
    %v662 = vlaneseq
    %v663 = vshrl.u32 %v662, 7
    %v664 = vsub.s32 %v216, %v663
    %v665 = vrot.slane %v598, %v664
    %v666 = vsel %vm520, %v665, %v661
    %v668 = vsel %vm286, %v666, -inf
    %669 = vmax.xlane.f32.xlu0 %v668
    %v670 = vpop.xlane.xlu0 %669
    %v672 = vlaneseq
    %v673 = vshrl.u32 %v672, 7
    %v674 = vsub.s32 0, %v673
    %v675 = vrot.slane %v670, %v674
    %v676 = vlaneseq
    %v677 = vshrl.u32 %v676, 7
    %v678 = vsub.s32 1, %v677
    %v679 = vrot.slane %v670, %v678
    %v682 = vsub.f32 %v595, %v675
    %v683 = vsub.f32 %v598, %v679
    %v684 = vmul.f32 %v682, 1.442695
    %v685 = vpow.pop %v684
    %v686 = vmul.f32 %v683, 1.442695
    %v687 = vpow.pop %v686
    %690 = vset.pattern.permute.xlu0 0
    %691 = vperm.xlu0 %690, %v685
    %v692 = vpop.permute.xlu0 %691
    %693 = vset.pattern.permute.xlu0 0
    %694 = vperm.xlu0 %693, %v687
    %v695 = vpop.permute.xlu0 %694
    %v696 = vlaneseq
    %v697 = vshrl.u32 %v696, 7
    %v698 = vsub.s32 %v216, %v697
    %v699 = vrot.slane %v692, %v698
    %v700 = vlaneseq
    %v701 = vshrl.u32 %v700, 7
    %v702 = vsub.s32 %v216, %v701
    %v703 = vrot.slane %v695, %v702
    %v704 = vsel %vm520, %v703, %v699
    %v706 = vsel %vm286, %v704, 0.0
    %707 = vadd.xlane.f32.xlu0 %v706
    %v708 = vpop.xlane.xlu0 %707
    %v709 = vlog2.pop %v708
    %v710 = vmul.f32 %v709, 0.6931472
    %v711 = vadd.f32 %v670, %v710
    %v712 = vsub.f32 0.0, %v711
    %vm713 = vcmask 7168
    %v714 = vsel %vm713, %v655, %v712
    %vm715 = vcmask 9216
    %716 = vst.msk [vmem:[%s6] sm:$0x3] %vm715, %v714
    // Predicated region
    $region22: #{reader3_forward.1} parent=1 // pred_check
      _
    $region23: #{reader3_forward.1} parent=1 // pred_check_branch
      %718 = sbr.rel (0) target = $region25
    $region24: #{reader3_forward.1} parent=1 // pred_region
      %s720 = ssub.s32 768, 768
      %721 = vsyncadd [#allocation3], %s720
      %s722 = sshll.u32 [#allocation2], 4
      %s723 = int_to_ptr.vmem [resolvable:$true] %s722
      %728 = dma.vmem_to_hbm [thread:$0]  %s723, 768, %s5, [#allocation3], 128, 128, 8
    $region25: #{reader3_forward.1} parent=1 // pred_fallthru
      _
    // Predicated region
    $region26: #{reader3_forward.1} parent=1 // pred_check
      _
    $region27: #{reader3_forward.1} parent=1 // pred_check_branch
      %730 = sbr.rel (0) target = $region29
    $region28: #{reader3_forward.1} parent=1 // pred_region
      _
    $region29: #{reader3_forward.1} parent=1 // pred_fallthru
      _
    // Predicated region
    $region30: #{reader3_forward.1} parent=1 // pred_check
      _
    $region31: #{reader3_forward.1} parent=1 // pred_check_branch
      %732 = sbr.rel (0) target = $region33
    $region32: #{reader3_forward.1} parent=1 // pred_region
      %733 = dma.done [#allocation3], 768
    $region33: #{reader3_forward.1} parent=1 // pred_fallthru
      _
    // Predicated region
    $region34: #{reader3_forward.1} parent=1 // pred_check
      _
    $region35: #{reader3_forward.1} parent=1 // pred_check_branch
      %735 = sbr.rel (0) target = $region37
    $region36: #{reader3_forward.1} parent=1 // pred_region
      _
    $region37: #{reader3_forward.1} parent=1 // pred_fallthru
      _
    %736 = vsyncpa [#allocation3], 1

</llo_original>
